<compile_context>
chip_gen: v6e
topology: v6e:2x2x1
jax: 0.10.0
libtpu: 0.0.40
codegen_flags: <defaults>
</compile_context>

<pallas_src>
import functools

import jax
import jax.numpy as jnp
from jax.experimental import pallas as pl
from jax.experimental.pallas import tpu as pltpu


# ---------------------------------------------------------------------------
# Fused kernel: (5x5 conv ∘ 1x1 conv) as 5 banded matmuls -> ReLU.
# One grid step processes B vertically-stacked, H-padded images.
# ---------------------------------------------------------------------------
def fused_conv_kernel(x_ref, w_ref, o_ref, *, B, H, Hp, K):
    # x_ref : (1, B*Hp, W*Cin)   B images, each H-padded to Hp rows, stacked
    # w_ref : (K, W*Cin, W*Cout) banded, 1x1-folded 5x5 weights
    # o_ref : (B, H, W*Cout)
    wcout = w_ref.shape[-1]
    # Rows of the accumulator that carry valid outputs: image b's output row h
    # lives at accumulator row b*Hp + h.  M = (B-1)*Hp + H covers all of them
    # (and, with Hp a multiple of 8, M is sublane-aligned for H mult. of 8).
    M = (B - 1) * Hp + H
    acc = jnp.zeros((M, wcout), dtype=jnp.float32)
    # K lane-dense MXU matmuls, contraction depth = W*Cin (= 128 here).
    for kh in range(K):
        acc += jnp.dot(x_ref[0, kh:kh + M, :], w_ref[kh],
                       preferred_element_type=jnp.float32)
    out = jnp.maximum(acc, 0.0)
    # Per-image extraction: row offsets b*Hp are multiples of 8 by
    # construction, so these are aligned sublane slices + dense stores.
    for b in range(B):
        o_ref[b] = out[b * Hp:b * Hp + H, :].astype(o_ref.dtype)


# ---------------------------------------------------------------------------
# One-time weight packing (hoisted out of the per-call forward path).
# ---------------------------------------------------------------------------
def pack_weights(w1_oihw, w2_oihw, W, compute_dtype=jnp.float32):
    """w1: (Cmid, Cin, K, K), w2: (Cout, Cmid, 1, 1) -> banded (K, W*Cin, W*Cout)."""
    K = w1_oihw.shape[-1]
    pad = (K - 1) // 2                       # assumes odd K (K=5 here)
    Cin = w1_oihw.shape[1]
    Cout = w2_oihw.shape[0]

    # Fold the 1x1 conv into the 5x5 conv weights (exact: no nonlinearity
    # between conv1 and conv2).
    w2_mat = w2_oihw[:, :, 0, 0]                                  # (Cout, Cmid)
    w_fused = jnp.einsum("om,mikl->oikl", w2_mat, w1_oihw)        # (Cout, Cin, K, K)
    w_hwio = jnp.transpose(w_fused, (2, 3, 1, 0))                 # (K, K, Cin, Cout)

    # Banded matrix per kh tap:
    #   B[kh][w_in*Cin + ci, w_out*Cout + co] = w_hwio[kh, kw, ci, co]
    # with kw = w_in - w_out + pad when 0 <= kw < K, else 0 (folds the
    # W-direction zero padding of the conv into the weights).
    w_in = jnp.arange(W)[:, None]
    w_out = jnp.arange(W)[None, :]
    kw_idx = w_in - w_out + pad                                   # (W, W)
    valid = (kw_idx >= 0) & (kw_idx < K)
    kw_safe = jnp.clip(kw_idx, 0, K - 1)
    band = w_hwio[:, kw_safe]                                     # (K, W, W, Cin, Cout)
    band = jnp.where(valid[None, :, :, None, None], band, jnp.zeros((), band.dtype))
    w_banded = band.transpose(0, 1, 3, 2, 4).reshape(K, W * Cin, W * Cout)
    return w_banded.astype(compute_dtype)


# ---------------------------------------------------------------------------
# Forward pass: only layout plumbing + one pallas_call per call.
# ---------------------------------------------------------------------------
@functools.partial(jax.jit, static_argnames=("block_images", "compute_dtype"))
def model_forward(x_nchw, w_banded, block_images=2, compute_dtype=jnp.float32):
    """x_nchw: (N, Cin, H, W); w_banded: packed (K, W*Cin, W*Cout)."""
    N, Cin, H, W = x_nchw.shape
    K = w_banded.shape[0]
    pad = (K - 1) // 2
    WCin = W * Cin
    WCout = w_banded.shape[-1]
    Cout = WCout // W
    assert w_banded.shape[1] == WCin, "packed weights do not match input layout"

    # VMEM guard: banded weights grow O(W^2 * Cin * Cout).
    w_bytes = w_banded.size * w_banded.dtype.itemsize
    assert w_bytes <= 8 * 1024 * 1024, (
        "banded weight slab too large to keep resident in VMEM"
    )  # TODO(synk): fall back to tiling the W*Cout dimension for large W.

    B = block_images
    if N % B != 0:
        B = 1  # TODO(synk): pad N instead for batch sizes not divisible by B.

    # Padded height rounded up to a sublane multiple (8) so per-image row
    # offsets inside the stacked slab are 8-aligned.
    Hp = H + 2 * pad
    Hp = ((Hp + 7) // 8) * 8

    # Activation layout: NCHW -> (N, H, W*Cin), pad rows (H only; W padding is
    # folded into the banded weights), stack B images per slab.
    x_rows = jnp.transpose(x_nchw, (0, 2, 3, 1)).reshape(N, H, WCin)
    x_rows = jnp.pad(x_rows, ((0, 0), (pad, Hp - H - pad), (0, 0)))
    x_slab = x_rows.reshape(N // B, B * Hp, WCin).astype(compute_dtype)

    kernel = functools.partial(fused_conv_kernel, B=B, H=H, Hp=Hp, K=K)

    flops = 2 * N * H * K * WCin * WCout
    bytes_accessed = (
        x_slab.size * x_slab.dtype.itemsize
        + w_bytes
        + N * H * WCout * jnp.dtype(x_nchw.dtype).itemsize)

    out_rows = pl.pallas_call(
        kernel,
        out_shape=jax.ShapeDtypeStruct((N, H, WCout), x_nchw.dtype),
        grid_spec=pltpu.PrefetchScalarGridSpec(
            num_scalar_prefetch=0,
            grid=(N // B,),
            in_specs=[
                pl.BlockSpec((1, B * Hp, WCin), lambda n: (n, 0, 0)),
                pl.BlockSpec((K, WCin, WCout), lambda n: (0, 0, 0)),
            ],
            out_specs=pl.BlockSpec((B, H, WCout), lambda n: (n, 0, 0)),
        ),
        compiler_params=pltpu.CompilerParams(
            dimension_semantics=("parallel",)),
        cost_estimate=pl.CostEstimate(
            flops=flops, transcendentals=0, bytes_accessed=bytes_accessed),
    )(x_slab, w_banded)

    # Back to PyTorch NCHW convention (output is already lane-dense).
    return jnp.transpose(out_rows.reshape(N, H, W, Cout), (0, 3, 1, 2))


def reference_forward(x_nchw, w1_oihw, w2_oihw):
    """Pure-JAX reference (lax conv) for correctness checking."""
    K = w1_oihw.shape[-1]
    pad = (K - 1) // 2
    v1 = jax.lax.conv_general_dilated(
        x_nchw, w1_oihw, window_strides=(1, 1), padding=((pad, pad), (pad, pad)),
        dimension_numbers=("NCHW", "OIHW", "NCHW"))
    v2 = jax.lax.conv_general_dilated(
        v1, w2_oihw, window_strides=(1, 1), padding=((0, 0), (0, 0)),
        dimension_numbers=("NCHW", "OIHW", "NCHW"))
    return jnp.maximum(jnp.maximum(v2, 0.0), 0.0)


if __name__ == "__main__":
    # Small shapes consistent with the module structure (chosen so that
    # W*Cin = W*Cout = 128, i.e. fully lane-dense tiles):
    #   conv1: Cin -> Cmid, 5x5, pad 2 ; conv2: Cmid -> Cout, 1x1 ; relu; relu
    N, Cin, H, W = 4, 8, 16, 16
    Cmid, Cout = 16, 8
    K = 5

    key = jax.random.PRNGKey(0)
    kx, kw1, kw2 = jax.random.split(key, 3)
    x = jax.random.normal(kx, (N, Cin, H, W), dtype=jnp.float32)
    # Deterministic Kaiming-uniform-like init (exact distribution irrelevant).
    fan1 = Cin * K * K
    w1 = jax.random.uniform(kw1, (Cmid, Cin, K, K), dtype=jnp.float32,
                            minval=-1.0, maxval=1.0) / jnp.sqrt(fan1)
    fan2 = Cmid
    w2 = jax.random.uniform(kw2, (Cout, Cmid, 1, 1), dtype=jnp.float32,
                            minval=-1.0, maxval=1.0) / jnp.sqrt(fan2)

    ref = jax.block_until_ready(reference_forward(x, w1, w2))

    # --- f32 path (tight tolerance; default on v5e) --------------------------
    w_packed_f32 = jax.block_until_ready(
        pack_weights(w1, w2, W, compute_dtype=jnp.float32))
    out = jax.block_until_ready(
        model_forward(x, w_packed_f32, block_images=2,
                      compute_dtype=jnp.float32))
    assert out.shape == (N, Cout, H, W), out.shape
    assert jnp.allclose(out, ref, atol=1e-4, rtol=1e-4), float(
        jnp.max(jnp.abs(out - ref)))

    # --- bf16-operand path (v6e/v7x MXU-native; f32 accumulate) -------------
    w_packed_bf16 = jax.block_until_ready(
        pack_weights(w1, w2, W, compute_dtype=jnp.bfloat16))
    out_bf16 = jax.block_until_ready(
        model_forward(x, w_packed_bf16, block_images=2,
                      compute_dtype=jnp.bfloat16))
    assert out_bf16.shape == (N, Cout, H, W), out_bf16.shape
    assert jnp.allclose(out_bf16, ref, atol=5e-2, rtol=5e-2), float(
        jnp.max(jnp.abs(out_bf16 - ref)))

    print("KERNEL_OK")
</pallas_src>

<mosaic_0001>
module attributes {stable_mosaic.version = 11 : i64} {
  func.func @fused_conv_kernel(%arg0: i32, %arg1: memref<1x48x128xf32, #tpu.memory_space<vmem>>, %arg2: memref<5x128x128xf32, #tpu.memory_space<vmem>>, %arg3: memref<2x16x128xf32, #tpu.memory_space<vmem>>) attributes {dimension_semantics = [#tpu.dimension_semantics<parallel>], iteration_bounds = array<i64: 2>, scalar_prefetch = 0 : i64, scratch_operands = 0 : i64, tpu.core_type = #tpu.core_type<tc>, window_params = [{transform_indices = @transform_0, window_bounds = array<i64: 1, 48, 128>}, {pipeline_mode = #tpu.pipeline_mode<synchronous>, transform_indices = @transform_1, window_bounds = array<i64: 5, 128, 128>}, {transform_indices = @transform_2, window_bounds = array<i64: 2, 16, 128>}]} {
    %cst = arith.constant 0.000000e+00 : f32
    %0 = vector.broadcast %cst : f32 to vector<40x128xf32>
    %c0 = arith.constant 0 : index
    %c0_0 = arith.constant 0 : index
    %c0_1 = arith.constant 0 : index
    %1 = vector.load %arg1[%c0, %c0_0, %c0_1] : memref<1x48x128xf32, #tpu.memory_space<vmem>>, vector<1x40x128xf32>
    %2 = vector.shape_cast %1 : vector<1x40x128xf32> to vector<40x128xf32>
    %c0_2 = arith.constant 0 : index
    %c0_3 = arith.constant 0 : index
    %c0_4 = arith.constant 0 : index
    %3 = vector.load %arg2[%c0_2, %c0_3, %c0_4] : memref<5x128x128xf32, #tpu.memory_space<vmem>>, vector<1x128x128xf32>
    %4 = vector.shape_cast %3 : vector<1x128x128xf32> to vector<128x128xf32>
    %cst_5 = arith.constant dense<0.000000e+00> : vector<40x128xf32>
    %5 = tpu.matmul %2, %4, %cst_5 {dimension_numbers = #tpu.dot_dimension_numbers<[1], [0], [0], [1], [0, 0, 1, 1], [], []>} : vector<40x128xf32>, vector<128x128xf32>, vector<40x128xf32> -> vector<40x128xf32>
    %6 = arith.addf %0, %5 : vector<40x128xf32>
    %c0_6 = arith.constant 0 : index
    %c1 = arith.constant 1 : index
    %c0_7 = arith.constant 0 : index
    %7 = vector.load %arg1[%c0_6, %c1, %c0_7] : memref<1x48x128xf32, #tpu.memory_space<vmem>>, vector<1x40x128xf32>
    %8 = vector.shape_cast %7 : vector<1x40x128xf32> to vector<40x128xf32>
    %c1_8 = arith.constant 1 : index
    %c0_9 = arith.constant 0 : index
    %c0_10 = arith.constant 0 : index
    %9 = vector.load %arg2[%c1_8, %c0_9, %c0_10] : memref<5x128x128xf32, #tpu.memory_space<vmem>>, vector<1x128x128xf32>
    %10 = vector.shape_cast %9 : vector<1x128x128xf32> to vector<128x128xf32>
    %cst_11 = arith.constant dense<0.000000e+00> : vector<40x128xf32>
    %11 = tpu.matmul %8, %10, %cst_11 {dimension_numbers = #tpu.dot_dimension_numbers<[1], [0], [0], [1], [0, 0, 1, 1], [], []>} : vector<40x128xf32>, vector<128x128xf32>, vector<40x128xf32> -> vector<40x128xf32>
    %12 = arith.addf %6, %11 : vector<40x128xf32>
    %c0_12 = arith.constant 0 : index
    %c2 = arith.constant 2 : index
    %c0_13 = arith.constant 0 : index
    %13 = vector.load %arg1[%c0_12, %c2, %c0_13] : memref<1x48x128xf32, #tpu.memory_space<vmem>>, vector<1x40x128xf32>
    %14 = vector.shape_cast %13 : vector<1x40x128xf32> to vector<40x128xf32>
    %c2_14 = arith.constant 2 : index
    %c0_15 = arith.constant 0 : index
    %c0_16 = arith.constant 0 : index
    %15 = vector.load %arg2[%c2_14, %c0_15, %c0_16] : memref<5x128x128xf32, #tpu.memory_space<vmem>>, vector<1x128x128xf32>
    %16 = vector.shape_cast %15 : vector<1x128x128xf32> to vector<128x128xf32>
    %cst_17 = arith.constant dense<0.000000e+00> : vector<40x128xf32>
    %17 = tpu.matmul %14, %16, %cst_17 {dimension_numbers = #tpu.dot_dimension_numbers<[1], [0], [0], [1], [0, 0, 1, 1], [], []>} : vector<40x128xf32>, vector<128x128xf32>, vector<40x128xf32> -> vector<40x128xf32>
    %18 = arith.addf %12, %17 : vector<40x128xf32>
    %c0_18 = arith.constant 0 : index
    %c3 = arith.constant 3 : index
    %c0_19 = arith.constant 0 : index
    %19 = vector.load %arg1[%c0_18, %c3, %c0_19] : memref<1x48x128xf32, #tpu.memory_space<vmem>>, vector<1x40x128xf32>
    %20 = vector.shape_cast %19 : vector<1x40x128xf32> to vector<40x128xf32>
    %c3_20 = arith.constant 3 : index
    %c0_21 = arith.constant 0 : index
    %c0_22 = arith.constant 0 : index
    %21 = vector.load %arg2[%c3_20, %c0_21, %c0_22] : memref<5x128x128xf32, #tpu.memory_space<vmem>>, vector<1x128x128xf32>
    %22 = vector.shape_cast %21 : vector<1x128x128xf32> to vector<128x128xf32>
    %cst_23 = arith.constant dense<0.000000e+00> : vector<40x128xf32>
    %23 = tpu.matmul %20, %22, %cst_23 {dimension_numbers = #tpu.dot_dimension_numbers<[1], [0], [0], [1], [0, 0, 1, 1], [], []>} : vector<40x128xf32>, vector<128x128xf32>, vector<40x128xf32> -> vector<40x128xf32>
    %24 = arith.addf %18, %23 : vector<40x128xf32>
    %c0_24 = arith.constant 0 : index
    %c4 = arith.constant 4 : index
    %c0_25 = arith.constant 0 : index
    %25 = vector.load %arg1[%c0_24, %c4, %c0_25] : memref<1x48x128xf32, #tpu.memory_space<vmem>>, vector<1x40x128xf32>
    %26 = vector.shape_cast %25 : vector<1x40x128xf32> to vector<40x128xf32>
    %c4_26 = arith.constant 4 : index
    %c0_27 = arith.constant 0 : index
    %c0_28 = arith.constant 0 : index
    %27 = vector.load %arg2[%c4_26, %c0_27, %c0_28] : memref<5x128x128xf32, #tpu.memory_space<vmem>>, vector<1x128x128xf32>
    %28 = vector.shape_cast %27 : vector<1x128x128xf32> to vector<128x128xf32>
    %cst_29 = arith.constant dense<0.000000e+00> : vector<40x128xf32>
    %29 = tpu.matmul %26, %28, %cst_29 {dimension_numbers = #tpu.dot_dimension_numbers<[1], [0], [0], [1], [0, 0, 1, 1], [], []>} : vector<40x128xf32>, vector<128x128xf32>, vector<40x128xf32> -> vector<40x128xf32>
    %30 = arith.addf %24, %29 : vector<40x128xf32>
    %cst_30 = arith.constant 0.000000e+00 : f32
    %31 = vector.broadcast %cst_30 : f32 to vector<40x128xf32>
    %32 = arith.maximumf %30, %31 : vector<40x128xf32>
    %33 = vector.extract_strided_slice %32 {offsets = [0, 0], sizes = [16, 128], strides = [1, 1]} : vector<40x128xf32> to vector<16x128xf32>
    %c0_31 = arith.constant 0 : index
    %c0_32 = arith.constant 0 : index
    %c0_33 = arith.constant 0 : index
    %34 = vector.load %arg3[%c0_31, %c0_32, %c0_33] : memref<2x16x128xf32, #tpu.memory_space<vmem>>, vector<1x16x128xf32>
    %35 = vector.shape_cast %34 : vector<1x16x128xf32> to vector<16x128xf32>
    %36 = vector.shape_cast %33 : vector<16x128xf32> to vector<1x16x128xf32>
    tpu.vector_store %arg3[%c0_31, %c0_32, %c0_33], %36 {strides = array<i32>} : memref<2x16x128xf32, #tpu.memory_space<vmem>>, vector<1x16x128xf32>,
    %37 = vector.extract_strided_slice %32 {offsets = [24, 0], sizes = [16, 128], strides = [1, 1]} : vector<40x128xf32> to vector<16x128xf32>
    %c1_34 = arith.constant 1 : index
    %c0_35 = arith.constant 0 : index
    %c0_36 = arith.constant 0 : index
    %38 = vector.load %arg3[%c1_34, %c0_35, %c0_36] : memref<2x16x128xf32, #tpu.memory_space<vmem>>, vector<1x16x128xf32>
    %39 = vector.shape_cast %38 : vector<1x16x128xf32> to vector<16x128xf32>
    %40 = vector.shape_cast %37 : vector<16x128xf32> to vector<1x16x128xf32>
    tpu.vector_store %arg3[%c1_34, %c0_35, %c0_36], %40 {strides = array<i32>} : memref<2x16x128xf32, #tpu.memory_space<vmem>>, vector<1x16x128xf32>,
    return
  }
  func.func @transform_0(%arg0: i32) -> (i32, i32, i32) {
    %c0_i32 = arith.constant 0 : i32
    %c0_i32_0 = arith.constant 0 : i32
    %c0_i32_1 = arith.constant 0 : i32
    return %arg0, %c0_i32, %c0_i32_0 : i32, i32, i32
  }
  func.func @transform_1(%arg0: i32) -> (i32, i32, i32) {
    %c0_i32 = arith.constant 0 : i32
    %c0_i32_0 = arith.constant 0 : i32
    %c0_i32_1 = arith.constant 0 : i32
    %c0_i32_2 = arith.constant 0 : i32
    return %c0_i32, %c0_i32_0, %c0_i32_1 : i32, i32, i32
  }
  func.func @transform_2(%arg0: i32) -> (i32, i32, i32) {
    %c0_i32 = arith.constant 0 : i32
    %c0_i32_0 = arith.constant 0 : i32
    %c0_i32_1 = arith.constant 0 : i32
    return %arg0, %c0_i32, %c0_i32_0 : i32, i32, i32
  }
}

</mosaic_0001>

<llo_original>
// kernel: model_forward.1
$region0: #{model_forward.1}
  #allocation0 [shape = 'u32[]', space=smem, size = 0x4, offset = 0x4, fixed_abs, tag = 'smem constant byte address 0x4 - core index']
  #allocation1 [shape = 'u32[144,128]{1,0:T(1,128)}', space=vmem, size = 0x12000, scoped, tag = 'internal scratch']
  %s0 = inlined_call_operand.vmem [shape: f32[2,48,128], index: 0, kind: input, shape index: {}]
  %s1 = inlined_call_operand.vmem [shape: f32[5,128,128], index: 1, kind: input, shape index: {}]
  %s2 = inlined_call_operand.vmem [shape: f32[4,16,128], index: 2, kind: output, shape index: {}]
  %s3 = sld [smem:[#allocation0]]
  $region41: #{model_forward.1} parent=0
    _
  %s5 = ssub.s32 1, %s3
  %s6 = scalar_select 0, %s5, %s3
  loop: start=0, step=1, limit=4
  $region2: #{model_forward.1} parent=0 // loop_pre_header
    _
  $region3: #{model_forward.1} parent=0 // loop_header
    %s8 = sphi 0, %s12
    %p9 = scmp.ge.s32.totalorder %s8, 4
    %s18 = sphi 0, %s20
    %s21 = sphi 0, %s18
    %s22 = sphi 0, %s21
    %s38 = sphi 0, %s22
    %s42 = sphi 0, %s42
    %s44 = sphi 0, %s42
    %s45 = sphi 0, %s44
    %s59 = sphi 0, %s45
    %s65 = sphi 0, %s67
    %s68 = sphi 0, %s65
    %s69 = sphi 0, %s68
    %s85 = sphi 0, %s69
  $region4: #{model_forward.1} parent=0 // loop_header_branch
    %11 = sbr.rel (%p9) target = $region8
  $region5: #{model_forward.1} parent=0 // loop_body
    %s13 = ssub.s32 %s8, 1
    %s14 = ssub.s32 %s8, 2
    %s15 = sadd.s32 %s8, 1
    %s16 = ssub.s32 %s8, %s15
    %p17 = scmp.eq.s32.totalorder %s16, 0
    %s19 = sadd.s32 %s18, 1
    %s20 = scalar_select %p17, %s18, %s19
    %p23 = pneg %p17
    %p24 = scmp.eq.s32.totalorder %s8, 1
    %p25 = por %p23, %p24
    %p26 = scmp.ne.s32.totalorder %s18, %s21
    %p27 = scmp.eq.s32.totalorder %s8, 0
    %p28 = por %p26, %p27
    %p29 = scmp.ne.s32.totalorder %s18, %s21
    %p30 = scmp.eq.s32.totalorder %s13, 1
    %p31 = por %p29, %p30
    %p32 = scmp.ne.s32.totalorder %s21, %s22
    %p33 = scmp.eq.s32.totalorder %s13, 0
    %p34 = por %p32, %p33
    %p35 = scmp.ne.s32.totalorder %s21, %s22
    %p36 = scmp.eq.s32.totalorder %s14, 1
    %p37 = por %p35, %p36
    %p39 = scmp.ne.s32.totalorder %s22, %s38
    %p40 = scmp.eq.s32.totalorder %s14, 0
    %p41 = por %p39, %p40
    %s43 = sadd.s32 %s42, 1
    %p46 = scmp.eq.s32.totalorder %s8, 1
    %p47 = scmp.ne.s32.totalorder %s42, %s44
    %p48 = scmp.eq.s32.totalorder %s8, 0
    %p49 = por %p47, %p48
    %p50 = scmp.ne.s32.totalorder %s42, %s44
    %p51 = scmp.eq.s32.totalorder %s13, 1
    %p52 = por %p50, %p51
    %p53 = scmp.ne.s32.totalorder %s44, %s45
    %p54 = scmp.eq.s32.totalorder %s13, 0
    %p55 = por %p53, %p54
    %p56 = scmp.ne.s32.totalorder %s44, %s45
    %p57 = scmp.eq.s32.totalorder %s14, 1
    %p58 = por %p56, %p57
    %p60 = scmp.ne.s32.totalorder %s45, %s59
    %p61 = scmp.eq.s32.totalorder %s14, 0
    %p62 = por %p60, %p61
    %s63 = ssub.s32 %s8, %s15
    %p64 = scmp.eq.s32.totalorder %s63, 0
    %s66 = sadd.s32 %s65, 1
    %s67 = scalar_select %p64, %s65, %s66
    %p70 = pneg %p64
    %p71 = scmp.eq.s32.totalorder %s8, 1
    %p72 = por %p70, %p71
    %p73 = scmp.ne.s32.totalorder %s65, %s68
    %p74 = scmp.eq.s32.totalorder %s8, 0
    %p75 = por %p73, %p74
    %p76 = scmp.ne.s32.totalorder %s65, %s68
    %p77 = scmp.eq.s32.totalorder %s13, 1
    %p78 = por %p76, %p77
    %p79 = scmp.ne.s32.totalorder %s68, %s69
    %p80 = scmp.eq.s32.totalorder %s13, 0
    %p81 = por %p79, %p80
    %p82 = scmp.ne.s32.totalorder %s68, %s69
    %p83 = scmp.eq.s32.totalorder %s14, 1
    %p84 = por %p82, %p83
    %p86 = scmp.ne.s32.totalorder %s69, %s85
    %p87 = scmp.eq.s32.totalorder %s14, 0
    %p88 = por %p86, %p87
    %p89 = scmp.le.s32.totalorder 1, %s8
    %p90 = scmp.lt.s32.totalorder %s8, 3
    %p91 = pnand %p89, %p90
    %p92 = pneg %p91
    // Predicated region
    $region9: #{model_forward.1} parent=5 // pred_check
      _
    $region10: #{model_forward.1} parent=5 // pred_check_branch
      %94 = sbr.rel (%p91) target = $region12
    $region11: #{model_forward.1} parent=5 // pred_region
      %s95 = ssub.s32 %s8, 1
      // Predicated region
      $region13: #{model_forward.1} parent=11 // pred_check
        %p96 = pneg %p55
      $region14: #{model_forward.1} parent=11 // pred_check_branch
        %98 = sbr.rel (%p96) target = $region16
      $region15: #{model_forward.1} parent=11 // pred_region
        _
      $region16: #{model_forward.1} parent=11 // pred_fallthru
        _
    $region12: #{model_forward.1} parent=5 // pred_fallthru
      _
    %p99 = scmp.lt.s32.totalorder %s8, 2
    // Predicated region
    $region17: #{model_forward.1} parent=5 // pred_check
      %p100 = pneg %p99
    $region18: #{model_forward.1} parent=5 // pred_check_branch
      %102 = sbr.rel (%p100) target = $region20
    $region19: #{model_forward.1} parent=5 // pred_region
      // Predicated region
      $region21: #{model_forward.1} parent=19 // pred_check
        %p103 = pneg %p28
      $region22: #{model_forward.1} parent=19 // pred_check_branch
        %105 = sbr.rel (%p103) target = $region24
      $region23: #{model_forward.1} parent=19 // pred_region
        %p106 = scmp.lt.s32.totalorder %s8, 1
        %s107 = scalar_select %p106, %s8, 1
        %s108 = smul.addr %s107, 6
        %s109 = smul.addr %s108, 8
        %s110 = scalar_lea.vmem %s0, %s109
      $region24: #{model_forward.1} parent=19 // pred_fallthru
        _
    $region20: #{model_forward.1} parent=5 // pred_fallthru
      _
    %p111 = scmp.le.s32.totalorder 1, %s8
    %p112 = scmp.lt.s32.totalorder %s8, 3
    %p113 = pnand %p111, %p112
    %p114 = pneg %p113
    // Predicated region
    $region25: #{model_forward.1} parent=5 // pred_check
      _
    $region26: #{model_forward.1} parent=5 // pred_check_branch
      %116 = sbr.rel (%p113) target = $region28
    $region27: #{model_forward.1} parent=5 // pred_region
      %s117 = ssub.s32 %s8, 1
      %p118 = scmp.lt.s32.totalorder %s13, 1
      %s119 = scalar_select %p118, %s13, 1
      %s120 = smul.addr %s119, 6
      %s121 = smul.addr %s120, 8
      %s122 = scalar_lea.vmem %s0, %s121
      %p123 = pneg %p34
      %p124 = pneg %p31
      %p125 = pneg %p55
      %p126 = pneg %p52
      %p127 = pneg %p81
      %p128 = pneg %p78
      %s129 = smul.u32 2, %s13
      %p130 = scmp.lt.s32.totalorder %s129, 3
      %s131 = scalar_select %p130, %s129, 3
      %s132 = smul.addr %s131, 2
      %s133 = smul.addr %s132, 8
      %s134 = scalar_lea.vmem %s2, %s133
      %p135 = scmp.lt.s32.totalorder %s13, 1
      %s136 = scalar_select %p135, %s13, 1
      %s137 = smul.addr %s136, 6
      %s138 = smul.addr %s137, 8
      %s139 = scalar_lea.vmem %s0, %s138
      %s140 = smul.u32 2, %s13
      %p141 = scmp.lt.s32.totalorder %s140, 3
      %s142 = scalar_select %p141, %s140, 3
      %s143 = smul.addr %s142, 2
      %s144 = smul.addr %s143, 8
      %s145 = scalar_lea.vmem %s2, %s144
      %s146 = smul.u32 2, %s13
      %v147 = vld [vmem:[%s139] sm:$0xff]
      %v148 = vld [vmem:[%s139 + $0x8] sm:$0xff]
      %v149 = vld [vmem:[%s139 + $0x10] sm:$0xff]
      %v150 = vld [vmem:[%s139 + $0x18] sm:$0xff]
      %v151 = vld [vmem:[%s139 + $0x20] sm:$0xff]
      %v152 = vld [vmem:[%s1] sm:$0xff]
      %v153 = vld [vmem:[%s1 + $0x8] sm:$0xff]
      %v154 = vld [vmem:[%s1 + $0x10] sm:$0xff]
      %v155 = vld [vmem:[%s1 + $0x18] sm:$0xff]
      %v156 = vld [vmem:[%s1 + $0x20] sm:$0xff]
      %v157 = vld [vmem:[%s1 + $0x28] sm:$0xff]
      %v158 = vld [vmem:[%s1 + $0x30] sm:$0xff]
      %v159 = vld [vmem:[%s1 + $0x38] sm:$0xff]
      %v160 = vld [vmem:[%s1 + $0x40] sm:$0xff]
      %v161 = vld [vmem:[%s1 + $0x48] sm:$0xff]
      %v162 = vld [vmem:[%s1 + $0x50] sm:$0xff]
      %v163 = vld [vmem:[%s1 + $0x58] sm:$0xff]
      %v164 = vld [vmem:[%s1 + $0x60] sm:$0xff]
      %v165 = vld [vmem:[%s1 + $0x68] sm:$0xff]
      %v166 = vld [vmem:[%s1 + $0x70] sm:$0xff]
      %v167 = vld [vmem:[%s1 + $0x78] sm:$0xff]
      %v168 = vld [vmem:[%s139 + $0x1] sm:$0xff]
      %v169 = vld [vmem:[%s139 + $0x9] sm:$0xff]
      %v170 = vld [vmem:[%s139 + $0x11] sm:$0xff]
      %v171 = vld [vmem:[%s139 + $0x19] sm:$0xff]
      %v172 = vld [vmem:[%s139 + $0x21] sm:$0xff]
      %s173 = scalar_lea.vmem %s1, 128
      %v174 = vld [vmem:[%s173] sm:$0xff]
      %v175 = vld [vmem:[%s173 + $0x8] sm:$0xff]
      %v176 = vld [vmem:[%s173 + $0x10] sm:$0xff]
      %v177 = vld [vmem:[%s173 + $0x18] sm:$0xff]
      %v178 = vld [vmem:[%s173 + $0x20] sm:$0xff]
      %v179 = vld [vmem:[%s173 + $0x28] sm:$0xff]
      %v180 = vld [vmem:[%s173 + $0x30] sm:$0xff]
      %v181 = vld [vmem:[%s173 + $0x38] sm:$0xff]
      %v182 = vld [vmem:[%s173 + $0x40] sm:$0xff]
      %v183 = vld [vmem:[%s173 + $0x48] sm:$0xff]
      %v184 = vld [vmem:[%s173 + $0x50] sm:$0xff]
      %v185 = vld [vmem:[%s173 + $0x58] sm:$0xff]
      %v186 = vld [vmem:[%s173 + $0x60] sm:$0xff]
      %v187 = vld [vmem:[%s173 + $0x68] sm:$0xff]
      %v188 = vld [vmem:[%s173 + $0x70] sm:$0xff]
      %v189 = vld [vmem:[%s173 + $0x78] sm:$0xff]
      %190 = vmatprep.subr.mxu0 0.0
      %191 = vmatpush1.msra.mxu0 %v189
      %192 = vmatprep.subr.mxu0 0.0
      %193 = vmatpush1.msra.mxu0 %v188
      %194 = vmatprep.subr.mxu0 0.0
      %195 = vmatpush1.msra.mxu0 %v187
      %196 = vmatprep.subr.mxu0 0.0
      %197 = vmatpush1.msra.mxu0 %v186
      %198 = vmatprep.subr.mxu0 0.0
      %199 = vmatpush1.msra.mxu0 %v185
      %200 = vmatprep.subr.mxu0 0.0
      %201 = vmatpush1.msra.mxu0 %v184
      %202 = vmatprep.subr.mxu0 0.0
      %203 = vmatpush1.msra.mxu0 %v183
      %204 = vmatprep.subr.mxu0 0.0
      %205 = vmatpush1.msra.mxu0 %v182
      %206 = vmatprep.subr.mxu0 0.0
      %207 = vmatpush1.msra.mxu0 %v181
      %208 = vmatprep.subr.mxu0 0.0
      %209 = vmatpush1.msra.mxu0 %v180
      %210 = vmatprep.subr.mxu0 0.0
      %211 = vmatpush1.msra.mxu0 %v179
      %212 = vmatprep.subr.mxu0 0.0
      %213 = vmatpush1.msra.mxu0 %v178
      %214 = vmatprep.subr.mxu0 0.0
      %215 = vmatpush1.msra.mxu0 %v177
      %216 = vmatprep.subr.mxu0 0.0
      %217 = vmatpush1.msra.mxu0 %v176
      %218 = vmatprep.subr.mxu0 0.0
      %219 = vmatpush1.msra.mxu0 %v175
      %220 = vmatprep.subr.mxu0 0.0
      %221 = vmatpush1.msra.mxu0 %v174
      %222 = vmatprep.subr.mxu0 0.0
      %223 = vmatpush2.msra.mxu0 0.0
      %224 = vmatprep.subr.mxu0 0.0
      %225 = vmatpush2.msra.mxu0 0.0
      %226 = vmatprep.subr.mxu0 0.0
      %227 = vmatpush2.msra.mxu0 0.0
      %228 = vmatprep.subr.mxu0 0.0
      %229 = vmatpush2.msra.mxu0 0.0
      %230 = vmatprep.subr.mxu0 0.0
      %231 = vmatpush2.msra.mxu0 0.0
      %232 = vmatprep.subr.mxu0 0.0
      %233 = vmatpush2.msra.mxu0 0.0
      %234 = vmatprep.subr.mxu0 0.0
      %235 = vmatpush2.msra.mxu0 0.0
      %236 = vmatprep.subr.mxu0 0.0
      %237 = vmatpush2.msra.mxu0 0.0
      %238 = vmatprep.subr.mxu0 0.0
      %239 = vmatpush2.msra.mxu0 0.0
      %240 = vmatprep.subr.mxu0 0.0
      %241 = vmatpush2.msra.mxu0 0.0
      %242 = vmatprep.subr.mxu0 0.0
      %243 = vmatpush2.msra.mxu0 0.0
      %244 = vmatprep.subr.mxu0 0.0
      %245 = vmatpush2.msra.mxu0 0.0
      %246 = vmatprep.subr.mxu0 0.0
      %247 = vmatpush2.msra.mxu0 0.0
      %248 = vmatprep.subr.mxu0 0.0
      %249 = vmatpush2.msra.mxu0 0.0
      %250 = vmatprep.subr.mxu0 0.0
      %251 = vmatpush2.msra.mxu0 0.0
      %252 = vmatprep.subr.mxu0 0.0
      %253 = vmatpush2.msra.mxu0 0.0
      %254 = vmatprep.mubr.f32.mxu0 0.0
      %255 = vmatmul.mubr.f32.gmra.mxu0 %v168
      %v256 = vpop.f32.mrf.mxu0
      %v257 = vadd.f32 0.0, %v256
      %v258 = vpop.f32.mrf.mxu0
      %259 = vmatprep.mubr.f32.mxu0 0.0
      %260 = vmatmul.mubr.f32.gmra.mxu0 %v169
      %v261 = vpop.f32.mrf.mxu0
      %v262 = vadd.f32 0.0, %v261
      %v263 = vpop.f32.mrf.mxu0
      %264 = vmatprep.mubr.f32.mxu0 0.0
      %265 = vmatmul.mubr.f32.gmra.mxu0 %v170
      %v266 = vpop.f32.mrf.mxu0
      %v267 = vpop.f32.mrf.mxu0
      %268 = vmatprep.mubr.f32.mxu0 0.0
      %269 = vmatmul.mubr.f32.gmra.mxu0 %v171
      %v270 = vpop.f32.mrf.mxu0
      %v271 = vadd.f32 0.0, %v270
      %v272 = vpop.f32.mrf.mxu0
      %273 = vmatprep.mubr.f32.mxu0 0.0
      %274 = vmatmul.mubr.f32.gmra.mxu0 %v172
      %v275 = vpop.f32.mrf.mxu0
      %v276 = vadd.f32 0.0, %v275
      %v277 = vpop.f32.mrf.mxu0
      %278 = vdwg.mxu0
      %279 = vmatprep.subr.mxu0 0.0
      %280 = vmatpush1.msra.mxu0 %v167
      %281 = vmatprep.subr.mxu0 0.0
      %282 = vmatpush1.msra.mxu0 %v166
      %283 = vmatprep.subr.mxu0 0.0
      %284 = vmatpush1.msra.mxu0 %v165
      %285 = vmatprep.subr.mxu0 0.0
      %286 = vmatpush1.msra.mxu0 %v164
      %287 = vmatprep.subr.mxu0 0.0
      %288 = vmatpush1.msra.mxu0 %v163
      %289 = vmatprep.subr.mxu0 0.0
      %290 = vmatpush1.msra.mxu0 %v162
      %291 = vmatprep.subr.mxu0 0.0
      %292 = vmatpush1.msra.mxu0 %v161
      %293 = vmatprep.subr.mxu0 0.0
      %294 = vmatpush1.msra.mxu0 %v160
      %295 = vmatprep.subr.mxu0 0.0
      %296 = vmatpush1.msra.mxu0 %v159
      %297 = vmatprep.subr.mxu0 0.0
      %298 = vmatpush1.msra.mxu0 %v158
      %299 = vmatprep.subr.mxu0 0.0
      %300 = vmatpush1.msra.mxu0 %v157
      %301 = vmatprep.subr.mxu0 0.0
      %302 = vmatpush1.msra.mxu0 %v156
      %303 = vmatprep.subr.mxu0 0.0
      %304 = vmatpush1.msra.mxu0 %v155
      %305 = vmatprep.subr.mxu0 0.0
      %306 = vmatpush1.msra.mxu0 %v154
      %307 = vmatprep.subr.mxu0 0.0
      %308 = vmatpush1.msra.mxu0 %v153
      %309 = vmatprep.subr.mxu0 0.0
      %310 = vmatpush1.msra.mxu0 %v152
      %311 = vmatprep.subr.mxu0 0.0
      %312 = vmatpush2.msra.mxu0 0.0
      %313 = vmatprep.subr.mxu0 0.0
      %314 = vmatpush2.msra.mxu0 0.0
      %315 = vmatprep.subr.mxu0 0.0
      %316 = vmatpush2.msra.mxu0 0.0
      %317 = vmatprep.subr.mxu0 0.0
      %318 = vmatpush2.msra.mxu0 0.0
      %319 = vmatprep.subr.mxu0 0.0
      %320 = vmatpush2.msra.mxu0 0.0
      %321 = vmatprep.subr.mxu0 0.0
      %322 = vmatpush2.msra.mxu0 0.0
      %323 = vmatprep.subr.mxu0 0.0
      %324 = vmatpush2.msra.mxu0 0.0
      %325 = vmatprep.subr.mxu0 0.0
      %326 = vmatpush2.msra.mxu0 0.0
      %327 = vmatprep.subr.mxu0 0.0
      %328 = vmatpush2.msra.mxu0 0.0
      %329 = vmatprep.subr.mxu0 0.0
      %330 = vmatpush2.msra.mxu0 0.0
      %331 = vmatprep.subr.mxu0 0.0
      %332 = vmatpush2.msra.mxu0 0.0
      %333 = vmatprep.subr.mxu0 0.0
      %334 = vmatpush2.msra.mxu0 0.0
      %335 = vmatprep.subr.mxu0 0.0
      %336 = vmatpush2.msra.mxu0 0.0
      %337 = vmatprep.subr.mxu0 0.0
      %338 = vmatpush2.msra.mxu0 0.0
      %339 = vmatprep.subr.mxu0 0.0
      %340 = vmatpush2.msra.mxu0 0.0
      %341 = vmatprep.subr.mxu0 0.0
      %342 = vmatpush2.msra.mxu0 0.0
      %343 = vmatprep.mubr.f32.mxu0 0.0
      %344 = vmatmul.mubr.f32.gmra.mxu0 %v147
      %v345 = vpop.f32.mrf.mxu0
      %v346 = vadd.f32 %v257, %v345
      %v347 = vpop.f32.mrf.mxu0
      %348 = vmatprep.mubr.f32.mxu0 0.0
      %349 = vmatmul.mubr.f32.gmra.mxu0 %v148
      %v350 = vpop.f32.mrf.mxu0
      %v351 = vadd.f32 %v262, %v350
      %v352 = vpop.f32.mrf.mxu0
      %353 = vmatprep.mubr.f32.mxu0 0.0
      %354 = vmatmul.mubr.f32.gmra.mxu0 %v149
      %v355 = vpop.f32.mrf.mxu0
      %v356 = vpop.f32.mrf.mxu0
      %357 = vmatprep.mubr.f32.mxu0 0.0
      %358 = vmatmul.mubr.f32.gmra.mxu0 %v150
      %v359 = vpop.f32.mrf.mxu0
      %v360 = vadd.f32 %v271, %v359
      %v361 = vpop.f32.mrf.mxu0
      %362 = vmatprep.mubr.f32.mxu0 0.0
      %363 = vmatmul.mubr.f32.gmra.mxu0 %v151
      %v364 = vpop.f32.mrf.mxu0
      %v365 = vadd.f32 %v276, %v364
      %v366 = vpop.f32.mrf.mxu0
      %367 = vdwg.mxu0
      %v368 = vld [vmem:[%s139 + $0x2] sm:$0xff]
      %v369 = vld [vmem:[%s139 + $0xa] sm:$0xff]
      %v370 = vld [vmem:[%s139 + $0x12] sm:$0xff]
      %v371 = vld [vmem:[%s139 + $0x1a] sm:$0xff]
      %v372 = vld [vmem:[%s139 + $0x22] sm:$0xff]
      %s373 = scalar_lea.vmem %s1, 256
      %v374 = vld [vmem:[%s373] sm:$0xff]
      %v375 = vld [vmem:[%s373 + $0x8] sm:$0xff]
      %v376 = vld [vmem:[%s373 + $0x10] sm:$0xff]
      %v377 = vld [vmem:[%s373 + $0x18] sm:$0xff]
      %v378 = vld [vmem:[%s373 + $0x20] sm:$0xff]
      %v379 = vld [vmem:[%s373 + $0x28] sm:$0xff]
      %v380 = vld [vmem:[%s373 + $0x30] sm:$0xff]
      %v381 = vld [vmem:[%s373 + $0x38] sm:$0xff]
      %v382 = vld [vmem:[%s373 + $0x40] sm:$0xff]
      %v383 = vld [vmem:[%s373 + $0x48] sm:$0xff]
      %v384 = vld [vmem:[%s373 + $0x50] sm:$0xff]
      %v385 = vld [vmem:[%s373 + $0x58] sm:$0xff]
      %v386 = vld [vmem:[%s373 + $0x60] sm:$0xff]
      %v387 = vld [vmem:[%s373 + $0x68] sm:$0xff]
      %v388 = vld [vmem:[%s373 + $0x70] sm:$0xff]
      %v389 = vld [vmem:[%s373 + $0x78] sm:$0xff]
      %390 = vmatprep.subr.mxu0 0.0
      %391 = vmatpush1.msra.mxu0 %v389
      %392 = vmatprep.subr.mxu0 0.0
      %393 = vmatpush1.msra.mxu0 %v388
      %394 = vmatprep.subr.mxu0 0.0
      %395 = vmatpush1.msra.mxu0 %v387
      %396 = vmatprep.subr.mxu0 0.0
      %397 = vmatpush1.msra.mxu0 %v386
      %398 = vmatprep.subr.mxu0 0.0
      %399 = vmatpush1.msra.mxu0 %v385
      %400 = vmatprep.subr.mxu0 0.0
      %401 = vmatpush1.msra.mxu0 %v384
      %402 = vmatprep.subr.mxu0 0.0
      %403 = vmatpush1.msra.mxu0 %v383
      %404 = vmatprep.subr.mxu0 0.0
      %405 = vmatpush1.msra.mxu0 %v382
      %406 = vmatprep.subr.mxu0 0.0
      %407 = vmatpush1.msra.mxu0 %v381
      %408 = vmatprep.subr.mxu0 0.0
      %409 = vmatpush1.msra.mxu0 %v380
      %410 = vmatprep.subr.mxu0 0.0
      %411 = vmatpush1.msra.mxu0 %v379
      %412 = vmatprep.subr.mxu0 0.0
      %413 = vmatpush1.msra.mxu0 %v378
      %414 = vmatprep.subr.mxu0 0.0
      %415 = vmatpush1.msra.mxu0 %v377
      %416 = vmatprep.subr.mxu0 0.0
      %417 = vmatpush1.msra.mxu0 %v376
      %418 = vmatprep.subr.mxu0 0.0
      %419 = vmatpush1.msra.mxu0 %v375
      %420 = vmatprep.subr.mxu0 0.0
      %421 = vmatpush1.msra.mxu0 %v374
      %422 = vmatprep.subr.mxu0 0.0
      %423 = vmatpush2.msra.mxu0 0.0
      %424 = vmatprep.subr.mxu0 0.0
      %425 = vmatpush2.msra.mxu0 0.0
      %426 = vmatprep.subr.mxu0 0.0
      %427 = vmatpush2.msra.mxu0 0.0
      %428 = vmatprep.subr.mxu0 0.0
      %429 = vmatpush2.msra.mxu0 0.0
      %430 = vmatprep.subr.mxu0 0.0
      %431 = vmatpush2.msra.mxu0 0.0
      %432 = vmatprep.subr.mxu0 0.0
      %433 = vmatpush2.msra.mxu0 0.0
      %434 = vmatprep.subr.mxu0 0.0
      %435 = vmatpush2.msra.mxu0 0.0
      %436 = vmatprep.subr.mxu0 0.0
      %437 = vmatpush2.msra.mxu0 0.0
      %438 = vmatprep.subr.mxu0 0.0
      %439 = vmatpush2.msra.mxu0 0.0
      %440 = vmatprep.subr.mxu0 0.0
      %441 = vmatpush2.msra.mxu0 0.0
      %442 = vmatprep.subr.mxu0 0.0
      %443 = vmatpush2.msra.mxu0 0.0
      %444 = vmatprep.subr.mxu0 0.0
      %445 = vmatpush2.msra.mxu0 0.0
      %446 = vmatprep.subr.mxu0 0.0
      %447 = vmatpush2.msra.mxu0 0.0
      %448 = vmatprep.subr.mxu0 0.0
      %449 = vmatpush2.msra.mxu0 0.0
      %450 = vmatprep.subr.mxu0 0.0
      %451 = vmatpush2.msra.mxu0 0.0
      %452 = vmatprep.subr.mxu0 0.0
      %453 = vmatpush2.msra.mxu0 0.0
      %454 = vmatprep.mubr.f32.mxu0 0.0
      %455 = vmatmul.mubr.f32.gmra.mxu0 %v368
      %v456 = vpop.f32.mrf.mxu0
      %v457 = vadd.f32 0.0, %v456
      %v458 = vpop.f32.mrf.mxu0
      %459 = vmatprep.mubr.f32.mxu0 0.0
      %460 = vmatmul.mubr.f32.gmra.mxu0 %v369
      %v461 = vpop.f32.mrf.mxu0
      %v462 = vadd.f32 0.0, %v461
      %v463 = vpop.f32.mrf.mxu0
      %464 = vmatprep.mubr.f32.mxu0 0.0
      %465 = vmatmul.mubr.f32.gmra.mxu0 %v370
      %v466 = vpop.f32.mrf.mxu0
      %v467 = vpop.f32.mrf.mxu0
      %468 = vmatprep.mubr.f32.mxu0 0.0
      %469 = vmatmul.mubr.f32.gmra.mxu0 %v371
      %v470 = vpop.f32.mrf.mxu0
      %v471 = vadd.f32 0.0, %v470
      %v472 = vpop.f32.mrf.mxu0
      %473 = vmatprep.mubr.f32.mxu0 0.0
      %474 = vmatmul.mubr.f32.gmra.mxu0 %v372
      %v475 = vpop.f32.mrf.mxu0
      %v476 = vadd.f32 0.0, %v475
      %v477 = vpop.f32.mrf.mxu0
      %478 = vdwg.mxu0
      %v479 = vadd.f32 %v346, %v457
      %v480 = vadd.f32 %v351, %v462
      %v481 = vadd.f32 %v360, %v471
      %v482 = vadd.f32 %v365, %v476
      %v483 = vld [vmem:[%s139 + $0x3] sm:$0xff]
      %v484 = vld [vmem:[%s139 + $0xb] sm:$0xff]
      %v485 = vld [vmem:[%s139 + $0x13] sm:$0xff]
      %v486 = vld [vmem:[%s139 + $0x1b] sm:$0xff]
      %v487 = vld [vmem:[%s139 + $0x23] sm:$0xff]
      %s488 = scalar_lea.vmem %s1, 384
      %v489 = vld [vmem:[%s488] sm:$0xff]
      %v490 = vld [vmem:[%s488 + $0x8] sm:$0xff]
      %v491 = vld [vmem:[%s488 + $0x10] sm:$0xff]
      %v492 = vld [vmem:[%s488 + $0x18] sm:$0xff]
      %v493 = vld [vmem:[%s488 + $0x20] sm:$0xff]
      %v494 = vld [vmem:[%s488 + $0x28] sm:$0xff]
      %v495 = vld [vmem:[%s488 + $0x30] sm:$0xff]
      %v496 = vld [vmem:[%s488 + $0x38] sm:$0xff]
      %v497 = vld [vmem:[%s488 + $0x40] sm:$0xff]
      %v498 = vld [vmem:[%s488 + $0x48] sm:$0xff]
      %v499 = vld [vmem:[%s488 + $0x50] sm:$0xff]
      %v500 = vld [vmem:[%s488 + $0x58] sm:$0xff]
      %v501 = vld [vmem:[%s488 + $0x60] sm:$0xff]
      %v502 = vld [vmem:[%s488 + $0x68] sm:$0xff]
      %v503 = vld [vmem:[%s488 + $0x70] sm:$0xff]
      %v504 = vld [vmem:[%s488 + $0x78] sm:$0xff]
      %505 = vmatprep.subr.mxu0 0.0
      %506 = vmatpush1.msra.mxu0 %v504
      %507 = vmatprep.subr.mxu0 0.0
      %508 = vmatpush1.msra.mxu0 %v503
      %509 = vmatprep.subr.mxu0 0.0
      %510 = vmatpush1.msra.mxu0 %v502
      %511 = vmatprep.subr.mxu0 0.0
      %512 = vmatpush1.msra.mxu0 %v501
      %513 = vmatprep.subr.mxu0 0.0
      %514 = vmatpush1.msra.mxu0 %v500
      %515 = vmatprep.subr.mxu0 0.0
      %516 = vmatpush1.msra.mxu0 %v499
      %517 = vmatprep.subr.mxu0 0.0
      %518 = vmatpush1.msra.mxu0 %v498
      %519 = vmatprep.subr.mxu0 0.0
      %520 = vmatpush1.msra.mxu0 %v497
      %521 = vmatprep.subr.mxu0 0.0
      %522 = vmatpush1.msra.mxu0 %v496
      %523 = vmatprep.subr.mxu0 0.0
      %524 = vmatpush1.msra.mxu0 %v495
      %525 = vmatprep.subr.mxu0 0.0
      %526 = vmatpush1.msra.mxu0 %v494
      %527 = vmatprep.subr.mxu0 0.0
      %528 = vmatpush1.msra.mxu0 %v493
      %529 = vmatprep.subr.mxu0 0.0
      %530 = vmatpush1.msra.mxu0 %v492
      %531 = vmatprep.subr.mxu0 0.0
      %532 = vmatpush1.msra.mxu0 %v491
      %533 = vmatprep.subr.mxu0 0.0
      %534 = vmatpush1.msra.mxu0 %v490
      %535 = vmatprep.subr.mxu0 0.0
      %536 = vmatpush1.msra.mxu0 %v489
      %537 = vmatprep.subr.mxu0 0.0
      %538 = vmatpush2.msra.mxu0 0.0
      %539 = vmatprep.subr.mxu0 0.0
      %540 = vmatpush2.msra.mxu0 0.0
      %541 = vmatprep.subr.mxu0 0.0
      %542 = vmatpush2.msra.mxu0 0.0
      %543 = vmatprep.subr.mxu0 0.0
      %544 = vmatpush2.msra.mxu0 0.0
      %545 = vmatprep.subr.mxu0 0.0
      %546 = vmatpush2.msra.mxu0 0.0
      %547 = vmatprep.subr.mxu0 0.0
      %548 = vmatpush2.msra.mxu0 0.0
      %549 = vmatprep.subr.mxu0 0.0
      %550 = vmatpush2.msra.mxu0 0.0
      %551 = vmatprep.subr.mxu0 0.0
      %552 = vmatpush2.msra.mxu0 0.0
      %553 = vmatprep.subr.mxu0 0.0
      %554 = vmatpush2.msra.mxu0 0.0
      %555 = vmatprep.subr.mxu0 0.0
      %556 = vmatpush2.msra.mxu0 0.0
      %557 = vmatprep.subr.mxu0 0.0
      %558 = vmatpush2.msra.mxu0 0.0
      %559 = vmatprep.subr.mxu0 0.0
      %560 = vmatpush2.msra.mxu0 0.0
      %561 = vmatprep.subr.mxu0 0.0
      %562 = vmatpush2.msra.mxu0 0.0
      %563 = vmatprep.subr.mxu0 0.0
      %564 = vmatpush2.msra.mxu0 0.0
      %565 = vmatprep.subr.mxu0 0.0
      %566 = vmatpush2.msra.mxu0 0.0
      %567 = vmatprep.subr.mxu0 0.0
      %568 = vmatpush2.msra.mxu0 0.0
      %569 = vmatprep.mubr.f32.mxu0 0.0
      %570 = vmatmul.mubr.f32.gmra.mxu0 %v483
      %v571 = vpop.f32.mrf.mxu0
      %v572 = vadd.f32 0.0, %v571
      %v573 = vpop.f32.mrf.mxu0
      %574 = vmatprep.mubr.f32.mxu0 0.0
      %575 = vmatmul.mubr.f32.gmra.mxu0 %v484
      %v576 = vpop.f32.mrf.mxu0
      %v577 = vadd.f32 0.0, %v576
      %v578 = vpop.f32.mrf.mxu0
      %579 = vmatprep.mubr.f32.mxu0 0.0
      %580 = vmatmul.mubr.f32.gmra.mxu0 %v485
      %v581 = vpop.f32.mrf.mxu0
      %v582 = vpop.f32.mrf.mxu0
      %583 = vmatprep.mubr.f32.mxu0 0.0
      %584 = vmatmul.mubr.f32.gmra.mxu0 %v486
      %v585 = vpop.f32.mrf.mxu0
      %v586 = vadd.f32 0.0, %v585
      %v587 = vpop.f32.mrf.mxu0
      %588 = vmatprep.mubr.f32.mxu0 0.0
      %589 = vmatmul.mubr.f32.gmra.mxu0 %v487
      %v590 = vpop.f32.mrf.mxu0
      %v591 = vadd.f32 0.0, %v590
      %v592 = vpop.f32.mrf.mxu0
      %593 = vdwg.mxu0
      %v594 = vadd.f32 %v479, %v572
      %v595 = vadd.f32 %v480, %v577
      %v596 = vadd.f32 %v481, %v586
      %v597 = vadd.f32 %v482, %v591
      %v598 = vld [vmem:[%s139 + $0x4] sm:$0xff]
      %v599 = vld [vmem:[%s139 + $0xc] sm:$0xff]
      %v600 = vld [vmem:[%s139 + $0x14] sm:$0xff]
      %v601 = vld [vmem:[%s139 + $0x1c] sm:$0xff]
      %v602 = vld [vmem:[%s139 + $0x24] sm:$0xff]
      %s603 = scalar_lea.vmem %s1, 512
      %v604 = vld [vmem:[%s603] sm:$0xff]
      %v605 = vld [vmem:[%s603 + $0x8] sm:$0xff]
      %v606 = vld [vmem:[%s603 + $0x10] sm:$0xff]
      %v607 = vld [vmem:[%s603 + $0x18] sm:$0xff]
      %v608 = vld [vmem:[%s603 + $0x20] sm:$0xff]
      %v609 = vld [vmem:[%s603 + $0x28] sm:$0xff]
      %v610 = vld [vmem:[%s603 + $0x30] sm:$0xff]
      %v611 = vld [vmem:[%s603 + $0x38] sm:$0xff]
      %v612 = vld [vmem:[%s603 + $0x40] sm:$0xff]
      %v613 = vld [vmem:[%s603 + $0x48] sm:$0xff]
      %v614 = vld [vmem:[%s603 + $0x50] sm:$0xff]
      %v615 = vld [vmem:[%s603 + $0x58] sm:$0xff]
      %v616 = vld [vmem:[%s603 + $0x60] sm:$0xff]
      %v617 = vld [vmem:[%s603 + $0x68] sm:$0xff]
      %v618 = vld [vmem:[%s603 + $0x70] sm:$0xff]
      %v619 = vld [vmem:[%s603 + $0x78] sm:$0xff]
      %620 = vmatprep.subr.mxu0 0.0
      %621 = vmatpush1.msra.mxu0 %v619
      %622 = vmatprep.subr.mxu0 0.0
      %623 = vmatpush1.msra.mxu0 %v618
      %624 = vmatprep.subr.mxu0 0.0
      %625 = vmatpush1.msra.mxu0 %v617
      %626 = vmatprep.subr.mxu0 0.0
      %627 = vmatpush1.msra.mxu0 %v616
      %628 = vmatprep.subr.mxu0 0.0
      %629 = vmatpush1.msra.mxu0 %v615
      %630 = vmatprep.subr.mxu0 0.0
      %631 = vmatpush1.msra.mxu0 %v614
      %632 = vmatprep.subr.mxu0 0.0
      %633 = vmatpush1.msra.mxu0 %v613
      %634 = vmatprep.subr.mxu0 0.0
      %635 = vmatpush1.msra.mxu0 %v612
      %636 = vmatprep.subr.mxu0 0.0
      %637 = vmatpush1.msra.mxu0 %v611
      %638 = vmatprep.subr.mxu0 0.0
      %639 = vmatpush1.msra.mxu0 %v610
      %640 = vmatprep.subr.mxu0 0.0
      %641 = vmatpush1.msra.mxu0 %v609
      %642 = vmatprep.subr.mxu0 0.0
      %643 = vmatpush1.msra.mxu0 %v608
      %644 = vmatprep.subr.mxu0 0.0
      %645 = vmatpush1.msra.mxu0 %v607
      %646 = vmatprep.subr.mxu0 0.0
      %647 = vmatpush1.msra.mxu0 %v606
      %648 = vmatprep.subr.mxu0 0.0
      %649 = vmatpush1.msra.mxu0 %v605
      %650 = vmatprep.subr.mxu0 0.0
      %651 = vmatpush1.msra.mxu0 %v604
      %652 = vmatprep.subr.mxu0 0.0
      %653 = vmatpush2.msra.mxu0 0.0
      %654 = vmatprep.subr.mxu0 0.0
      %655 = vmatpush2.msra.mxu0 0.0
      %656 = vmatprep.subr.mxu0 0.0
      %657 = vmatpush2.msra.mxu0 0.0
      %658 = vmatprep.subr.mxu0 0.0
      %659 = vmatpush2.msra.mxu0 0.0
      %660 = vmatprep.subr.mxu0 0.0
      %661 = vmatpush2.msra.mxu0 0.0
      %662 = vmatprep.subr.mxu0 0.0
      %663 = vmatpush2.msra.mxu0 0.0
      %664 = vmatprep.subr.mxu0 0.0
      %665 = vmatpush2.msra.mxu0 0.0
      %666 = vmatprep.subr.mxu0 0.0
      %667 = vmatpush2.msra.mxu0 0.0
      %668 = vmatprep.subr.mxu0 0.0
      %669 = vmatpush2.msra.mxu0 0.0
      %670 = vmatprep.subr.mxu0 0.0
      %671 = vmatpush2.msra.mxu0 0.0
      %672 = vmatprep.subr.mxu0 0.0
      %673 = vmatpush2.msra.mxu0 0.0
      %674 = vmatprep.subr.mxu0 0.0
      %675 = vmatpush2.msra.mxu0 0.0
      %676 = vmatprep.subr.mxu0 0.0
      %677 = vmatpush2.msra.mxu0 0.0
      %678 = vmatprep.subr.mxu0 0.0
      %679 = vmatpush2.msra.mxu0 0.0
      %680 = vmatprep.subr.mxu0 0.0
      %681 = vmatpush2.msra.mxu0 0.0
      %682 = vmatprep.subr.mxu0 0.0
      %683 = vmatpush2.msra.mxu0 0.0
      %684 = vmatprep.mubr.f32.mxu0 0.0
      %685 = vmatmul.mubr.f32.gmra.mxu0 %v598
      %v686 = vpop.f32.mrf.mxu0
      %v687 = vadd.f32 0.0, %v686
      %v688 = vpop.f32.mrf.mxu0
      %689 = vmatprep.mubr.f32.mxu0 0.0
      %690 = vmatmul.mubr.f32.gmra.mxu0 %v599
      %v691 = vpop.f32.mrf.mxu0
      %v692 = vadd.f32 0.0, %v691
      %v693 = vpop.f32.mrf.mxu0
      %694 = vmatprep.mubr.f32.mxu0 0.0
      %695 = vmatmul.mubr.f32.gmra.mxu0 %v600
      %v696 = vpop.f32.mrf.mxu0
      %v697 = vpop.f32.mrf.mxu0
      %698 = vmatprep.mubr.f32.mxu0 0.0
      %699 = vmatmul.mubr.f32.gmra.mxu0 %v601
      %v700 = vpop.f32.mrf.mxu0
      %v701 = vadd.f32 0.0, %v700
      %v702 = vpop.f32.mrf.mxu0
      %703 = vmatprep.mubr.f32.mxu0 0.0
      %704 = vmatmul.mubr.f32.gmra.mxu0 %v602
      %v705 = vpop.f32.mrf.mxu0
      %v706 = vadd.f32 0.0, %v705
      %v707 = vpop.f32.mrf.mxu0
      %708 = vdwg.mxu0
      %v709 = vadd.f32 %v594, %v687
      %v710 = vadd.f32 %v595, %v692
      %v711 = vadd.f32 %v596, %v701
      %v712 = vadd.f32 %v597, %v706
      %v713 = vmax.f32 %v709, 0.0
      %v714 = vmax.f32 %v710, 0.0
      %v715 = vmax.f32 %v711, 0.0
      %v716 = vmax.f32 %v712, 0.0
      %717 = vst [vmem:[%s145] sm:$0xff] %v713
      %718 = vst [vmem:[%s145 + $0x8] sm:$0xff] %v714
      %s719 = scalar_lea.vmem %s145, 16
      %720 = vst [vmem:[%s719] sm:$0xff] %v715
      %721 = vst [vmem:[%s719 + $0x8] sm:$0xff] %v716
      %s722 = smul.u32 2, %s13
      %p723 = scmp.lt.s32.totalorder %s722, 3
      %s724 = scalar_select %p723, %s722, 3
      %s725 = smul.addr %s724, 2
      %s726 = smul.addr %s725, 8
      %s727 = scalar_lea.vmem %s2, %s726
      // Predicated region
      $region29: #{model_forward.1} parent=27 // pred_check
        %p728 = pneg %p78
      $region30: #{model_forward.1} parent=27 // pred_check_branch
        %730 = sbr.rel (%p728) target = $region32
      $region31: #{model_forward.1} parent=27 // pred_region
        %s731 = smul.u32 2, %s13
      $region32: #{model_forward.1} parent=27 // pred_fallthru
        _
    $region28: #{model_forward.1} parent=5 // pred_fallthru
      _
    %p732 = scmp.le.s32.totalorder 2, %s8
    // Predicated region
    $region33: #{model_forward.1} parent=5 // pred_check
      %p733 = pneg %p732
    $region34: #{model_forward.1} parent=5 // pred_check_branch
      %735 = sbr.rel (%p733) target = $region36
    $region35: #{model_forward.1} parent=5 // pred_region
      %s736 = ssub.s32 %s8, 2
      // Predicated region
      $region37: #{model_forward.1} parent=35 // pred_check
        %p737 = pneg %p84
      $region38: #{model_forward.1} parent=35 // pred_check_branch
        %739 = sbr.rel (%p737) target = $region40
      $region39: #{model_forward.1} parent=35 // pred_region
        %s740 = smul.u32 2, %s14
        %p741 = scmp.lt.s32.totalorder %s740, 3
        %s742 = scalar_select %p741, %s740, 3
        %s743 = smul.addr %s742, 2
        %s744 = smul.addr %s743, 8
        %s745 = scalar_lea.vmem %s2, %s744
      $region40: #{model_forward.1} parent=35 // pred_fallthru
        _
    $region36: #{model_forward.1} parent=5 // pred_fallthru
      _
  $region6: #{model_forward.1} parent=0 // loop_footer
    %s12 = sadd.s32 1, %s8
  $region7: #{model_forward.1} parent=0 // loop_footer_branch
    %7 = sbr.rel target = $region3
  $region8: #{model_forward.1} parent=0 // loop_exit
    _

</llo_original>
